<compile_context>
chip_gen: v6e
topology: v6e:2x2x1
jax: 0.10.0
libtpu: 0.0.40
codegen_flags: <defaults>
</compile_context>

<pallas_src>
import jax
import jax.numpy as jnp
import numpy as np
from jax.experimental import pallas as pl
from jax.experimental.pallas import tpu as pltpu


def _make_gather_kernel(out_rows, pack):
    """Build a kernel that gathers out_rows*pack table rows in one shot."""

    def kernel(ts_ref, table_ref, out_ref):
        # ts_ref:    (batch_pad,) int32 in SMEM (scalar prefetch)
        # table_ref: (n_rows, 1, embed_dim) f32 in VMEM (whole table resident)
        # out_ref:   (out_rows, pack*embed_dim) f32 in VMEM
        rows = []
        for r in range(out_rows):
            pieces = []
            for c in range(pack):
                idx = ts_ref[r * pack + c]          # scalar SMEM read
                pieces.append(table_ref[idx])       # dynamic leading-axis index -> (1, embed_dim)
            row = pieces[0] if pack == 1 else jnp.concatenate(pieces, axis=-1)
            rows.append(row)
        full = rows[0] if out_rows == 1 else jnp.concatenate(rows, axis=0)
        out_ref[...] = full                         # single lane-dense slab store

    return kernel


def timestep_embed(timesteps, sinusoids):
    """Pallas equivalent of Timestep.forward: returns sinusoids[timesteps]."""
    orig_shape = timesteps.shape
    n_rows, embed_dim = sinusoids.shape

    flat = timesteps.reshape(-1).astype(jnp.int32)
    # Clamp to the valid table range (matches a well-formed torch gather; avoids
    # any out-of-bounds VMEM access inside the kernel).
    flat = jnp.clip(flat, 0, n_rows - 1)
    batch = flat.shape[0]

    # Pack `pack` embeddings per output row so the kernel output's last dim is a
    # multiple of 128 lanes (unmasked stores) whenever embed_dim divides 128.
    if embed_dim < 128 and 128 % embed_dim == 0:
        pack = 128 // embed_dim
    else:
        pack = 1

    batch_pad = ((batch + pack - 1) // pack) * pack
    if batch_pad != batch:
        flat = jnp.concatenate(
            [flat, jnp.zeros((batch_pad - batch,), dtype=jnp.int32)])
    out_rows = batch_pad // pack
    out_width = pack * embed_dim

    # Present the table with the gather axis leading (untiled): (n_rows, 1, D).
    table3d = sinusoids.reshape(n_rows, 1, embed_dim)

    kernel = _make_gather_kernel(out_rows, pack)

    out = pl.pallas_call(
        kernel,
        out_shape=jax.ShapeDtypeStruct((out_rows, out_width), sinusoids.dtype),
        grid_spec=pltpu.PrefetchScalarGridSpec(
            num_scalar_prefetch=1,          # flat timestep indices -> SMEM
            grid=(1,),                      # single step: table resident, one in/out DMA
            in_specs=[
                # Whole table in VMEM, fetched once.
                pl.BlockSpec((n_rows, 1, embed_dim), lambda i, ts: (0, 0, 0)),
            ],
            out_specs=pl.BlockSpec((out_rows, out_width), lambda i, ts: (0, 0)),
        ),
        compiler_params=pltpu.CompilerParams(
            dimension_semantics=("arbitrary",)),
    )(flat, table3d)

    # Unpack the lane-dense layout back to (batch, embed_dim), drop padding,
    # restore the caller's leading shape.
    out = out.reshape(-1, embed_dim)[:batch]
    return out.reshape(*orig_shape, embed_dim)


def make_sinusoids(embed_dim, n_steps, max_wavelength=10000.0):
    """Deterministic buffer construction, mirroring Timestep.__init__."""
    assert embed_dim % 2 == 0
    timescales = np.power(max_wavelength, -np.arange(0, embed_dim, 2) / embed_dim)
    timesteps = np.arange(n_steps + 1)
    angles = timesteps[:, np.newaxis] * timescales[np.newaxis, :]
    sinusoids = np.concatenate([np.sin(angles), np.cos(angles)], axis=-1)
    return jnp.asarray(sinusoids, dtype=jnp.float32)


if __name__ == "__main__":
    embed_dim = 32
    n_steps = 100

    sinusoids = make_sinusoids(embed_dim, n_steps)          # (101, 32) float32

    key = jax.random.PRNGKey(0)
    timesteps = jax.random.randint(key, (8,), 0, n_steps + 1, dtype=jnp.int32)

    out = timestep_embed(timesteps, sinusoids)
    out = jax.block_until_ready(out)

    # Reference check against the plain-JAX gather (exactly what torch does).
    ref = sinusoids[timesteps]
    assert out.shape == (8, embed_dim) and out.dtype == jnp.float32
    np.testing.assert_allclose(np.asarray(out), np.asarray(ref), rtol=0.0, atol=0.0)

    print("KERNEL_OK")
</pallas_src>

<mosaic_0001>
module attributes {stable_mosaic.version = 11 : i64} {
  func.func @kernel(%arg0: i32, %arg1: memref<8xi32, #tpu.memory_space<smem>>, %arg2: memref<101x1x32xf32, #tpu.memory_space<vmem>>, %arg3: memref<2x128xf32, #tpu.memory_space<vmem>>) attributes {dimension_semantics = [#tpu.dimension_semantics<arbitrary>], iteration_bounds = array<i64: 1>, scalar_prefetch = 1 : i64, scratch_operands = 0 : i64, tpu.core_type = #tpu.core_type<tc>, window_params = [{pipeline_mode = #tpu.pipeline_mode<synchronous>, transform_indices = @transform_0, window_bounds = array<i64: 101, 1, 32>}, {pipeline_mode = #tpu.pipeline_mode<synchronous>, transform_indices = @transform_1, window_bounds = array<i64: 2, 128>}]} {
    %c0 = arith.constant 0 : index
    %0 = memref.load %arg1[%c0] : memref<8xi32, #tpu.memory_space<smem>>
    %1 = arith.index_cast %0 : i32 to index
    %c0_0 = arith.constant 0 : index
    %c0_1 = arith.constant 0 : index
    %2 = vector.load %arg2[%1, %c0_0, %c0_1] : memref<101x1x32xf32, #tpu.memory_space<vmem>>, vector<1x1x32xf32>
    %3 = vector.shape_cast %2 : vector<1x1x32xf32> to vector<1x32xf32>
    %c1 = arith.constant 1 : index
    %4 = memref.load %arg1[%c1] : memref<8xi32, #tpu.memory_space<smem>>
    %5 = arith.index_cast %4 : i32 to index
    %c0_2 = arith.constant 0 : index
    %c0_3 = arith.constant 0 : index
    %6 = vector.load %arg2[%5, %c0_2, %c0_3] : memref<101x1x32xf32, #tpu.memory_space<vmem>>, vector<1x1x32xf32>
    %7 = vector.shape_cast %6 : vector<1x1x32xf32> to vector<1x32xf32>
    %c2 = arith.constant 2 : index
    %8 = memref.load %arg1[%c2] : memref<8xi32, #tpu.memory_space<smem>>
    %9 = arith.index_cast %8 : i32 to index
    %c0_4 = arith.constant 0 : index
    %c0_5 = arith.constant 0 : index
    %10 = vector.load %arg2[%9, %c0_4, %c0_5] : memref<101x1x32xf32, #tpu.memory_space<vmem>>, vector<1x1x32xf32>
    %11 = vector.shape_cast %10 : vector<1x1x32xf32> to vector<1x32xf32>
    %c3 = arith.constant 3 : index
    %12 = memref.load %arg1[%c3] : memref<8xi32, #tpu.memory_space<smem>>
    %13 = arith.index_cast %12 : i32 to index
    %c0_6 = arith.constant 0 : index
    %c0_7 = arith.constant 0 : index
    %14 = vector.load %arg2[%13, %c0_6, %c0_7] : memref<101x1x32xf32, #tpu.memory_space<vmem>>, vector<1x1x32xf32>
    %15 = vector.shape_cast %14 : vector<1x1x32xf32> to vector<1x32xf32>
    %16 = tpu.concatenate %3, %7, %11, %15 in 1 : vector<1x32xf32>, vector<1x32xf32>, vector<1x32xf32>, vector<1x32xf32> -> vector<1x128xf32>
    %c4 = arith.constant 4 : index
    %17 = memref.load %arg1[%c4] : memref<8xi32, #tpu.memory_space<smem>>
    %18 = arith.index_cast %17 : i32 to index
    %c0_8 = arith.constant 0 : index
    %c0_9 = arith.constant 0 : index
    %19 = vector.load %arg2[%18, %c0_8, %c0_9] : memref<101x1x32xf32, #tpu.memory_space<vmem>>, vector<1x1x32xf32>
    %20 = vector.shape_cast %19 : vector<1x1x32xf32> to vector<1x32xf32>
    %c5 = arith.constant 5 : index
    %21 = memref.load %arg1[%c5] : memref<8xi32, #tpu.memory_space<smem>>
    %22 = arith.index_cast %21 : i32 to index
    %c0_10 = arith.constant 0 : index
    %c0_11 = arith.constant 0 : index
    %23 = vector.load %arg2[%22, %c0_10, %c0_11] : memref<101x1x32xf32, #tpu.memory_space<vmem>>, vector<1x1x32xf32>
    %24 = vector.shape_cast %23 : vector<1x1x32xf32> to vector<1x32xf32>
    %c6 = arith.constant 6 : index
    %25 = memref.load %arg1[%c6] : memref<8xi32, #tpu.memory_space<smem>>
    %26 = arith.index_cast %25 : i32 to index
    %c0_12 = arith.constant 0 : index
    %c0_13 = arith.constant 0 : index
    %27 = vector.load %arg2[%26, %c0_12, %c0_13] : memref<101x1x32xf32, #tpu.memory_space<vmem>>, vector<1x1x32xf32>
    %28 = vector.shape_cast %27 : vector<1x1x32xf32> to vector<1x32xf32>
    %c7 = arith.constant 7 : index
    %29 = memref.load %arg1[%c7] : memref<8xi32, #tpu.memory_space<smem>>
    %30 = arith.index_cast %29 : i32 to index
    %c0_14 = arith.constant 0 : index
    %c0_15 = arith.constant 0 : index
    %31 = vector.load %arg2[%30, %c0_14, %c0_15] : memref<101x1x32xf32, #tpu.memory_space<vmem>>, vector<1x1x32xf32>
    %32 = vector.shape_cast %31 : vector<1x1x32xf32> to vector<1x32xf32>
    %33 = tpu.concatenate %20, %24, %28, %32 in 1 : vector<1x32xf32>, vector<1x32xf32>, vector<1x32xf32>, vector<1x32xf32> -> vector<1x128xf32>
    %34 = tpu.concatenate %16, %33 in 0 : vector<1x128xf32>, vector<1x128xf32> -> vector<2x128xf32>
    %c0_16 = arith.constant 0 : index
    %c0_17 = arith.constant 0 : index
    %35 = vector.load %arg3[%c0_16, %c0_17] : memref<2x128xf32, #tpu.memory_space<vmem>>, vector<2x128xf32>
    tpu.vector_store %arg3[%c0_16, %c0_17], %34 {strides = array<i32>} : memref<2x128xf32, #tpu.memory_space<vmem>>, vector<2x128xf32>,
    return
  }
  func.func @transform_0(%arg0: i32, %arg1: memref<8xi32, #tpu.memory_space<smem>>) -> (i32, i32, i32) {
    %c0_i32 = arith.constant 0 : i32
    %c0_i32_0 = arith.constant 0 : i32
    %c0_i32_1 = arith.constant 0 : i32
    %c0_i32_2 = arith.constant 0 : i32
    return %c0_i32, %c0_i32_0, %c0_i32_1 : i32, i32, i32
  }
  func.func @transform_1(%arg0: i32, %arg1: memref<8xi32, #tpu.memory_space<smem>>) -> (i32, i32) {
    %c0_i32 = arith.constant 0 : i32
    %c0_i32_0 = arith.constant 0 : i32
    %c0_i32_1 = arith.constant 0 : i32
    return %c0_i32, %c0_i32_0 : i32, i32
  }
}

</mosaic_0001>

<llo_original>
// kernel: tpu_custom_call.1
$region0: #{tpu_custom_call.1}
  #allocation0 [shape = 'u32[]', space=smem, size = 0x4, offset = 0x4, fixed_abs, tag = 'smem constant byte address 0x4 - core index']
  #allocation1 [shape = 'u32[144,128]{1,0:T(1,128)}', space=vmem, size = 0x12000, scoped, tag = 'internal scratch']
  #allocation2 [shape = 's32[1]{0}', space=sflag, size = 0x4, scoped, tag = 'scoped memory for tpu_custom_call.1']
  #allocation3 [shape = 'u8[512]{0}', space=smem, size = 0x200, scoped, tag = 'prefetched SMEM operand 0']
  %s0 = inlined_call_operand.vmem [shape: s32[8], index: 0, kind: input, shape index: {}]
  %s1 = inlined_call_operand.vmem [shape: f32[101,1,32], index: 1, kind: input, shape index: {}]
  %s2 = inlined_call_operand.hbm [shape: f32[2,128], index: 2, kind: output, shape index: {}]
  %s3 = sld [smem:[#allocation0]]
  $region14: #{tpu_custom_call.1} parent=0
    _
  %s5 = ssub.s32 1, %s3
  %s6 = scalar_select 0, %s5, %s3
  %s7 = sshll.u32 %s0, 4
  %s8 = int_to_ptr.vmem [resolvable:$true] %s7
  %10 = dma.vmem_to_smem %s8, 16, [#allocation3], [#allocation2]
  %11 = dma.done [#allocation2], 16
  %12 = sfence
  $region1: #{tpu_custom_call.1} parent=0
    #allocation4 [shape = 'u8[1024]{0}', space=vmem, size = 0x400, scoped, tag = 'output window, operand 0, single buffered']
    #allocation5 [shape = 's32[1]{0}', space=sflag, size = 0x4, scoped, tag = 'scoped memory for tpu_custom_call.1']
    %13 = vsyncpa [#allocation5], 0
    // Predicated region
    $region2: #{tpu_custom_call.1} parent=1 // pred_check
      _
    $region3: #{tpu_custom_call.1} parent=1 // pred_check_branch
      %15 = sbr.rel (0) target = $region5
    $region4: #{tpu_custom_call.1} parent=1 // pred_region
      _
    $region5: #{tpu_custom_call.1} parent=1 // pred_fallthru
      _
    %s16 = sld [smem:[#allocation3]]
    %s17 = scalar_lea.vmem %s1, %s16
    %v18 = vld [vmem:[%s17] sm:$0x1]
    %s19 = sld [smem:[#allocation3 + $0x1]]
    %s20 = scalar_lea.vmem %s1, %s19
    %v21 = vld [vmem:[%s20] sm:$0x1]
    %s22 = sld [smem:[#allocation3 + $0x2]]
    %s23 = scalar_lea.vmem %s1, %s22
    %v24 = vld [vmem:[%s23] sm:$0x1]
    %s25 = sld [smem:[#allocation3 + $0x3]]
    %s26 = scalar_lea.vmem %s1, %s25
    %v27 = vld [vmem:[%s26] sm:$0x1]
    %v29 = vlaneseq
    %v30 = vshrl.u32 %v29, 7
    %v31 = vsub.s32 0, %v30
    %v32 = vrot.slane %v21, %v31
    %33 = vrot.lane.b32.xlu0 %v32, 32
    %v34 = vpop.permute.xlu0 %33
    %v37 = vlaneseq
    %v38 = vshrl.u32 %v37, 7
    %v39 = vsub.s32 0, %v38
    %v40 = vrot.slane %v24, %v39
    %41 = vrot.lane.b32.xlu0 %v40, 64
    %v42 = vpop.permute.xlu0 %41
    %v45 = vlaneseq
    %v46 = vshrl.u32 %v45, 7
    %v47 = vsub.s32 0, %v46
    %v48 = vrot.slane %v27, %v47
    %49 = vrot.lane.b32.xlu0 %v48, 96
    %v50 = vpop.permute.xlu0 %49
    %vm52 = vcmask 261120
    %v53 = vsel %vm52, %v18, %v34
    %vm54 = vcmask 523264
    %v55 = vsel %vm54, %v53, %v42
    %vm56 = vcmask 785408
    %v57 = vsel %vm56, %v55, %v50
    %s58 = sld [smem:[#allocation3 + $0x4]]
    %s59 = scalar_lea.vmem %s1, %s58
    %v60 = vld [vmem:[%s59] sm:$0x1]
    %s61 = sld [smem:[#allocation3 + $0x5]]
    %s62 = scalar_lea.vmem %s1, %s61
    %v63 = vld [vmem:[%s62] sm:$0x1]
    %s64 = sld [smem:[#allocation3 + $0x6]]
    %s65 = scalar_lea.vmem %s1, %s64
    %v66 = vld [vmem:[%s65] sm:$0x1]
    %s67 = sld [smem:[#allocation3 + $0x7]]
    %s68 = scalar_lea.vmem %s1, %s67
    %v69 = vld [vmem:[%s68] sm:$0x1]
    %v71 = vlaneseq
    %v72 = vshrl.u32 %v71, 7
    %v73 = vsub.s32 0, %v72
    %v74 = vrot.slane %v63, %v73
    %75 = vrot.lane.b32.xlu0 %v74, 32
    %v76 = vpop.permute.xlu0 %75
    %v79 = vlaneseq
    %v80 = vshrl.u32 %v79, 7
    %v81 = vsub.s32 0, %v80
    %v82 = vrot.slane %v66, %v81
    %83 = vrot.lane.b32.xlu0 %v82, 64
    %v84 = vpop.permute.xlu0 %83
    %v87 = vlaneseq
    %v88 = vshrl.u32 %v87, 7
    %v89 = vsub.s32 0, %v88
    %v90 = vrot.slane %v69, %v89
    %91 = vrot.lane.b32.xlu0 %v90, 96
    %v92 = vpop.permute.xlu0 %91
    %v94 = vsel %vm52, %v60, %v76
    %v95 = vsel %vm54, %v94, %v84
    %v96 = vsel %vm56, %v95, %v92
    %v98 = vrot.slane %v96, 7
    %vm100 = vcmask 1040384
    %v101 = vsel %vm100, %v57, %v98
    %102 = vst [vmem:[#allocation4] sm:$0x3] %v101
    // Predicated region
    $region6: #{tpu_custom_call.1} parent=1 // pred_check
      _
    $region7: #{tpu_custom_call.1} parent=1 // pred_check_branch
      %104 = sbr.rel (0) target = $region9
    $region8: #{tpu_custom_call.1} parent=1 // pred_region
      %s106 = ssub.s32 32, 32
      %107 = vsyncadd [#allocation5], %s106
      %s109 = sshll.u32 [#allocation4], 4
      %s110 = int_to_ptr.vmem [resolvable:$true] %s109
      %112 = dma.vmem_to_hbm [thread:$0]  %s110, 32, %s2, [#allocation5]
    $region9: #{tpu_custom_call.1} parent=1 // pred_fallthru
      _
    // Predicated region
    $region10: #{tpu_custom_call.1} parent=1 // pred_check
      _
    $region11: #{tpu_custom_call.1} parent=1 // pred_check_branch
      %114 = sbr.rel (0) target = $region13
    $region12: #{tpu_custom_call.1} parent=1 // pred_region
      %115 = dma.done [#allocation5], 32
    $region13: #{tpu_custom_call.1} parent=1 // pred_fallthru
      _
    %116 = vsyncpa [#allocation5], 1

</llo_original>
